<compile_context>
chip_gen: v6e
topology: v6e:2x2x1
jax: 0.10.0
libtpu: 0.0.40
codegen_flags: <defaults>
</compile_context>

<pallas_src>
import functools

import jax
import jax.numpy as jnp
from jax.experimental import pallas as pl
from jax.experimental.pallas import tpu as pltpu


def _round_up(x, m):
    return (x + m - 1) // m * m


def base_forward_kernel(q_ref, t_ref, w_ref, p_ref, out_ref, *,
                        dq, dt, e, c, rq, rt, r3q, r3t, r4, pq, pt, p3, p4):
    """One batch tile. Compute is feature-major: activations are [features, tm]."""
    f32 = jnp.float32
    cdt = w_ref.dtype                   # MXU operand dtype (bf16 default); f32 accumulate

    # Batch-on-lanes activations from batch-major input tiles: the layout fix is done
    # in-kernel (cheap XLU transpose of narrow tiles) instead of a wrapper HBM copy.
    qT = q_ref[...].T.astype(cdt)       # (dq, tm)
    tT = t_ref[...].T.astype(cdt)       # (dt, tm)

    # statically sliced packed weights / biases
    wq = w_ref[rq:rq + e, :dq]          # fused load+embed (query branch)   (e, dq)
    wt = w_ref[rt:rt + e, :dt]          # fused load+embed (tuple branch)   (e, dt)
    w3q = w_ref[r3q:r3q + c, :e]        # classifier hidden, query half     (c, e)
    w3t = w_ref[r3t:r3t + c, :e]        # classifier hidden, tuple half     (c, e)
    w4 = w_ref[r4:r4 + 1, :c]           # head                              (1, c)

    bq = p_ref[pq:pq + e, :]            # (e, 1) f32
    bt = p_ref[pt:pt + e, :]            # (e, 1)
    b3 = p_ref[p3:p3 + c, :]            # (c, 1)
    b4 = p_ref[p4:p4 + 1, :]            # (1, 1)

    # fused loading+embedding per branch (+ ReLU); f32 accumulation
    hq = jnp.maximum(jnp.dot(wq, qT, preferred_element_type=f32) + bq, 0.0)
    ht = jnp.maximum(jnp.dot(wt, tT, preferred_element_type=f32) + bt, 0.0)

    # classifier hidden: concat(qe, te) @ Wc1 expressed as two dots (no concat copy)
    h = (jnp.dot(w3q, hq.astype(cdt), preferred_element_type=f32)
         + jnp.dot(w3t, ht.astype(cdt), preferred_element_type=f32) + b3)
    h = jnp.maximum(h, 0.0)

    # head + sigmoid, written as a lane-dense (1, tm) row
    logits = jnp.dot(w4, h.astype(cdt), preferred_element_type=f32) + b4
    out_ref[...] = jax.nn.sigmoid(logits).astype(out_ref.dtype)


def pack_params(params, compute_dtype):
    """Fold loading->embedding in f32, transpose to (out,in), and pack:
    all weights -> one compute-dtype array, all biases -> one f32 column."""
    (wql, bql, wtl, btl, wqe, bqe, wte, bte, wc1q, wc1t, bc1, wc2, bc2) = params
    f32 = jnp.float32
    dq = wql.shape[0]
    dt = wtl.shape[0]
    e = wqe.shape[1]
    c = wc1q.shape[1]

    # fold the activation-free loading layer into the embedding layer (in f32)
    wq_f = (wql.astype(f32) @ wqe.astype(f32)).T                         # (e, dq)
    wt_f = (wtl.astype(f32) @ wte.astype(f32)).T                         # (e, dt)
    bq_f = (bql.astype(f32) @ wqe.astype(f32) + bqe.astype(f32)).T       # (e, 1)
    bt_f = (btl.astype(f32) @ wte.astype(f32) + bte.astype(f32)).T       # (e, 1)
    w3q_f = wc1q.astype(f32).T                                           # (c, e)
    w3t_f = wc1t.astype(f32).T                                           # (c, e)
    w4_f = wc2.astype(f32).T                                             # (1, c)

    rq = 0
    rt = rq + _round_up(e, 8)
    r3q = rt + _round_up(e, 8)
    r3t = r3q + _round_up(c, 8)
    r4 = r3t + _round_up(c, 8)
    wrows = _round_up(r4 + 1, 8)
    wcols = max(dq, dt, e, c)
    W = jnp.zeros((wrows, wcols), f32)
    W = W.at[rq:rq + e, :dq].set(wq_f)
    W = W.at[rt:rt + e, :dt].set(wt_f)
    W = W.at[r3q:r3q + c, :e].set(w3q_f)
    W = W.at[r3t:r3t + c, :e].set(w3t_f)
    W = W.at[r4:r4 + 1, :c].set(w4_f)
    W = W.astype(compute_dtype)

    pq = 0
    pt = pq + _round_up(e, 8)
    p3 = pt + _round_up(e, 8)
    p4 = p3 + _round_up(c, 8)
    prows = _round_up(p4 + 1, 8)
    P = jnp.zeros((prows, 1), f32)
    P = P.at[pq:pq + e, :].set(bq_f)
    P = P.at[pt:pt + e, :].set(bt_f)
    P = P.at[p3:p3 + c, :].set(bc1.astype(f32).T)
    P = P.at[p4:p4 + 1, :].set(bc2.astype(f32))

    dims = dict(dq=dq, dt=dt, e=e, c=c, rq=rq, rt=rt, r3q=r3q, r3t=r3t, r4=r4,
                pq=pq, pt=pt, p3=p3, p4=p4)
    return W, P, dims


def _choose_tile(batch, tm_cap):
    """Lane-aligned batch tile; >= 2 parallel steps and an even step count
    (keeps both v7x TensorCores busy) whenever the batch allows it."""
    tm_cap = max(128, _round_up(tm_cap, 128))
    bp128 = _round_up(max(batch, 1), 128)
    if bp128 == 128:
        return 128, 128
    steps = max(2, pl.cdiv(bp128, tm_cap))
    if steps % 2:
        steps += 1
    tm = min(tm_cap, _round_up(pl.cdiv(batch, steps), 128))
    steps = pl.cdiv(batch, tm)
    if steps > 1 and steps % 2:
        steps += 1
    return tm, steps * tm


def base_model_forward(q, t, params, *, tm_cap=4096, compute_dtype=jnp.bfloat16):
    """Fused BASEModel forward. q:[B,Dq], t:[B,Dt] -> [B,1] sigmoid scores."""
    batch = q.shape[0]
    W, P, dims = pack_params(params, compute_dtype)
    tm, bp = _choose_tile(batch, tm_cap)
    grid = bp // tm

    # No host-side concat / transpose / cast of the activations; only pad the batch
    # when it is not already tile-aligned (tile-aligned batches skip this copy).
    if bp != batch:
        q = jnp.pad(q, ((0, bp - batch), (0, 0)))
        t = jnp.pad(t, ((0, bp - batch), (0, 0)))

    dq, dt, e, c = dims["dq"], dims["dt"], dims["e"], dims["c"]
    flops = 2 * bp * (dq * e + dt * e + 2 * e * c + c)
    bytes_accessed = (bp * (dq + dt) * q.dtype.itemsize + bp * 4
                      + W.size * W.dtype.itemsize + P.size * 4)
    cost = pl.CostEstimate(flops=int(flops), transcendentals=int(bp),
                           bytes_accessed=int(bytes_accessed))

    kernel = functools.partial(base_forward_kernel, **dims)

    def full(a):
        return pl.BlockSpec(a.shape, lambda i: (0, 0))     # grid-resident, fetched once

    out = pl.pallas_call(
        kernel,
        out_shape=jax.ShapeDtypeStruct((1, bp), jnp.float32),
        grid_spec=pltpu.PrefetchScalarGridSpec(
            num_scalar_prefetch=0,
            grid=(grid,),
            in_specs=[
                pl.BlockSpec((tm, dq), lambda i: (i, 0)),   # raw batch-major f32 tile
                pl.BlockSpec((tm, dt), lambda i: (i, 0)),   # raw batch-major f32 tile
                full(W),                                    # packed weights (compute dtype)
                full(P),                                    # packed biases (f32)
            ],
            out_specs=pl.BlockSpec((1, tm), lambda i: (0, i)),   # lane-dense score row
        ),
        compiler_params=pltpu.CompilerParams(
            dimension_semantics=("parallel",),
            vmem_limit_bytes=48 * 1024 * 1024),
        cost_estimate=cost,
    )(q, t, W, P)

    return out[0, :batch].reshape(batch, 1)


def base_model_reference(q, t, params):
    (wql, bql, wtl, btl, wqe, bqe, wte, bte, wc1q, wc1t, bc1, wc2, bc2) = params
    ql = q @ wql + bql
    tl = t @ wtl + btl
    qe = jax.nn.relu(ql @ wqe + bqe)
    te = jax.nn.relu(tl @ wte + bte)
    h = jax.nn.relu(jnp.concatenate([qe, te], axis=-1)
                    @ jnp.concatenate([wc1q, wc1t], axis=0) + bc1)
    return jax.nn.sigmoid(h @ wc2 + bc2)


def init_params(key, dq, dt, hidden, emb, chid):
    ks = jax.random.split(key, 13)

    def lin(k, fan_in, fan_out):
        scale = 1.0 / jnp.sqrt(jnp.float32(fan_in))
        return jax.random.uniform(k, (fan_in, fan_out), jnp.float32, -scale, scale)

    wql = lin(ks[0], dq, hidden); bql = jnp.zeros((1, hidden), jnp.float32)
    wtl = lin(ks[1], dt, hidden); btl = jnp.zeros((1, hidden), jnp.float32)
    wqe = lin(ks[2], hidden, emb); bqe = 0.01 * jnp.ones((1, emb), jnp.float32)
    wte = lin(ks[3], hidden, emb); bte = 0.01 * jnp.ones((1, emb), jnp.float32)
    wc1q = lin(ks[4], emb, chid)
    wc1t = lin(ks[5], emb, chid)
    bc1 = jnp.zeros((1, chid), jnp.float32)
    wc2 = lin(ks[6], chid, 1)
    bc2 = jnp.zeros((1, 1), jnp.float32)
    return (wql, bql, wtl, btl, wqe, bqe, wte, bte, wc1q, wc1t, bc1, wc2, bc2)


if __name__ == "__main__":
    B, DQ, DT, HID, EMB, CHID = 16, 32, 48, 32, 32, 64
    key = jax.random.PRNGKey(0)
    kq, kt, kp = jax.random.split(key, 3)

    query_vector = jax.random.normal(kq, (B, DQ), jnp.float32)
    tuple_vector = jax.random.normal(kt, (B, DT), jnp.float32)
    params = init_params(kp, DQ, DT, HID, EMB, CHID)
    ref = base_model_reference(query_vector, tuple_vector, params)

    # exact-math path (f32 operands) validates the layer fold + packing
    out_f32 = jax.block_until_ready(
        base_model_forward(query_vector, tuple_vector, params,
                           compute_dtype=jnp.float32))
    assert out_f32.shape == (B, 1)
    assert jnp.allclose(out_f32, ref, atol=1e-4, rtol=1e-4), "f32 kernel mismatch"

    # default fast path: bf16 MXU operands, f32 accumulation / elementwise
    out_bf16 = jax.block_until_ready(
        base_model_forward(query_vector, tuple_vector, params))
    assert out_bf16.shape == (B, 1)
    assert jnp.allclose(out_bf16, ref, atol=3e-2, rtol=2e-2), "bf16 kernel mismatch"

    # multi-tile path: batch padding + even 2-step parallel grid
    B2 = 300
    k2q, k2t = jax.random.split(jax.random.PRNGKey(1), 2)
    q2 = jax.random.normal(k2q, (B2, DQ), jnp.float32)
    t2 = jax.random.normal(k2t, (B2, DT), jnp.float32)
    ref2 = base_model_reference(q2, t2, params)
    out2 = jax.block_until_ready(base_model_forward(q2, t2, params))
    assert out2.shape == (B2, 1)
    assert jnp.allclose(out2, ref2, atol=3e-2, rtol=2e-2), "multi-tile kernel mismatch"

    # small tile cap forces a 4-step grid (exercises even-step selection)
    out3 = jax.block_until_ready(base_model_forward(q2, t2, params, tm_cap=128))
    assert jnp.allclose(out3, ref2, atol=3e-2, rtol=2e-2), "capped-tile kernel mismatch"

    print("KERNEL_OK")
</pallas_src>

<mosaic_0001>
module attributes {stable_mosaic.version = 11 : i64} {
  func.func @base_forward_kernel(%arg0: i32, %arg1: memref<128x32xf32, #tpu.memory_space<vmem>>, %arg2: memref<128x48xf32, #tpu.memory_space<vmem>>, %arg3: memref<200x64xf32, #tpu.memory_space<vmem>>, %arg4: memref<136x1xf32, #tpu.memory_space<vmem>>, %arg5: memref<1x128xf32, #tpu.memory_space<vmem>>) attributes {dimension_semantics = [#tpu.dimension_semantics<parallel>], iteration_bounds = array<i64: 1>, scalar_prefetch = 0 : i64, scratch_operands = 0 : i64, tpu.core_type = #tpu.core_type<tc>, window_params = [{transform_indices = @transform_0, window_bounds = array<i64: 128, 32>}, {transform_indices = @transform_1, window_bounds = array<i64: 128, 48>}, {pipeline_mode = #tpu.pipeline_mode<synchronous>, transform_indices = @transform_2, window_bounds = array<i64: 200, 64>}, {pipeline_mode = #tpu.pipeline_mode<synchronous>, transform_indices = @transform_3, window_bounds = array<i64: 136, 1>}, {transform_indices = @transform_4, window_bounds = array<i64: 1, 128>}]} {
    %c0 = arith.constant 0 : index
    %c0_0 = arith.constant 0 : index
    %0 = vector.load %arg1[%c0, %c0_0] : memref<128x32xf32, #tpu.memory_space<vmem>>, vector<128x32xf32>
    %1 = tpu.transpose %0, [1, 0] : vector<128x32xf32> -> vector<32x128xf32>
    %c0_1 = arith.constant 0 : index
    %c0_2 = arith.constant 0 : index
    %2 = vector.load %arg2[%c0_1, %c0_2] : memref<128x48xf32, #tpu.memory_space<vmem>>, vector<128x48xf32>
    %3 = tpu.transpose %2, [1, 0] : vector<128x48xf32> -> vector<48x128xf32>
    %c0_3 = arith.constant 0 : index
    %c0_4 = arith.constant 0 : index
    %4 = vector.load %arg3[%c0_3, %c0_4] : memref<200x64xf32, #tpu.memory_space<vmem>>, vector<32x32xf32>
    %c32 = arith.constant 32 : index
    %c0_5 = arith.constant 0 : index
    %5 = vector.load %arg3[%c32, %c0_5] : memref<200x64xf32, #tpu.memory_space<vmem>>, vector<32x48xf32>
    %c64 = arith.constant 64 : index
    %c0_6 = arith.constant 0 : index
    %6 = vector.load %arg3[%c64, %c0_6] : memref<200x64xf32, #tpu.memory_space<vmem>>, vector<64x32xf32>
    %c128 = arith.constant 128 : index
    %c0_7 = arith.constant 0 : index
    %7 = vector.load %arg3[%c128, %c0_7] : memref<200x64xf32, #tpu.memory_space<vmem>>, vector<64x32xf32>
    %c192 = arith.constant 192 : index
    %c0_8 = arith.constant 0 : index
    %8 = vector.load %arg3[%c192, %c0_8] : memref<200x64xf32, #tpu.memory_space<vmem>>, vector<1x64xf32>
    %c0_9 = arith.constant 0 : index
    %c0_10 = arith.constant 0 : index
    %9 = vector.load %arg4[%c0_9, %c0_10] : memref<136x1xf32, #tpu.memory_space<vmem>>, vector<32x1xf32>
    %c32_11 = arith.constant 32 : index
    %c0_12 = arith.constant 0 : index
    %10 = vector.load %arg4[%c32_11, %c0_12] : memref<136x1xf32, #tpu.memory_space<vmem>>, vector<32x1xf32>
    %c64_13 = arith.constant 64 : index
    %c0_14 = arith.constant 0 : index
    %11 = vector.load %arg4[%c64_13, %c0_14] : memref<136x1xf32, #tpu.memory_space<vmem>>, vector<64x1xf32>
    %c128_15 = arith.constant 128 : index
    %c0_16 = arith.constant 0 : index
    %12 = vector.load %arg4[%c128_15, %c0_16] : memref<136x1xf32, #tpu.memory_space<vmem>>, vector<1x1xf32>
    %cst = arith.constant dense<0.000000e+00> : vector<32x128xf32>
    %13 = tpu.matmul %4, %1, %cst {dimension_numbers = #tpu.dot_dimension_numbers<[1], [0], [0], [1], [0, 0, 1, 1], [], []>} : vector<32x32xf32>, vector<32x128xf32>, vector<32x128xf32> -> vector<32x128xf32>
    %14 = vector.broadcast %9 : vector<32x1xf32> to vector<32x128xf32>
    %15 = arith.addf %13, %14 : vector<32x128xf32>
    %cst_17 = arith.constant 0.000000e+00 : f32
    %16 = vector.broadcast %cst_17 : f32 to vector<32x128xf32>
    %17 = arith.maximumf %15, %16 : vector<32x128xf32>
    %cst_18 = arith.constant dense<0.000000e+00> : vector<32x128xf32>
    %18 = tpu.matmul %5, %3, %cst_18 {dimension_numbers = #tpu.dot_dimension_numbers<[1], [0], [0], [1], [0, 0, 1, 1], [], []>} : vector<32x48xf32>, vector<48x128xf32>, vector<32x128xf32> -> vector<32x128xf32>
    %19 = vector.broadcast %10 : vector<32x1xf32> to vector<32x128xf32>
    %20 = arith.addf %18, %19 : vector<32x128xf32>
    %cst_19 = arith.constant 0.000000e+00 : f32
    %21 = vector.broadcast %cst_19 : f32 to vector<32x128xf32>
    %22 = arith.maximumf %20, %21 : vector<32x128xf32>
    %cst_20 = arith.constant dense<0.000000e+00> : vector<64x128xf32>
    %23 = tpu.matmul %6, %17, %cst_20 {dimension_numbers = #tpu.dot_dimension_numbers<[1], [0], [0], [1], [0, 0, 1, 1], [], []>} : vector<64x32xf32>, vector<32x128xf32>, vector<64x128xf32> -> vector<64x128xf32>
    %cst_21 = arith.constant dense<0.000000e+00> : vector<64x128xf32>
    %24 = tpu.matmul %7, %22, %cst_21 {dimension_numbers = #tpu.dot_dimension_numbers<[1], [0], [0], [1], [0, 0, 1, 1], [], []>} : vector<64x32xf32>, vector<32x128xf32>, vector<64x128xf32> -> vector<64x128xf32>
    %25 = arith.addf %23, %24 : vector<64x128xf32>
    %26 = vector.broadcast %11 : vector<64x1xf32> to vector<64x128xf32>
    %27 = arith.addf %25, %26 : vector<64x128xf32>
    %cst_22 = arith.constant 0.000000e+00 : f32
    %28 = vector.broadcast %cst_22 : f32 to vector<64x128xf32>
    %29 = arith.maximumf %27, %28 : vector<64x128xf32>
    %cst_23 = arith.constant dense<0.000000e+00> : vector<1x128xf32>
    %30 = tpu.matmul %8, %29, %cst_23 {dimension_numbers = #tpu.dot_dimension_numbers<[1], [0], [0], [1], [0, 0, 1, 1], [], []>} : vector<1x64xf32>, vector<64x128xf32>, vector<1x128xf32> -> vector<1x128xf32>
    %31 = vector.broadcast %12 : vector<1x1xf32> to vector<1x128xf32>
    %32 = arith.addf %30, %31 : vector<1x128xf32>
    %33 = arith.negf %32 : vector<1x128xf32>
    %34 = math.exp %33 : vector<1x128xf32>
    %cst_24 = arith.constant 1.000000e+00 : f32
    %35 = vector.broadcast %cst_24 : f32 to vector<1x128xf32>
    %36 = arith.addf %35, %34 : vector<1x128xf32>
    %37 = arith.divf %35, %36 : vector<1x128xf32>
    %c0_25 = arith.constant 0 : index
    %c0_26 = arith.constant 0 : index
    %38 = vector.load %arg5[%c0_25, %c0_26] : memref<1x128xf32, #tpu.memory_space<vmem>>, vector<1x128xf32>
    tpu.vector_store %arg5[%c0_25, %c0_26], %37 {strides = array<i32>} : memref<1x128xf32, #tpu.memory_space<vmem>>, vector<1x128xf32>,
    return
  }
  func.func @transform_0(%arg0: i32) -> (i32, i32) {
    %c0_i32 = arith.constant 0 : i32
    %c0_i32_0 = arith.constant 0 : i32
    return %arg0, %c0_i32 : i32, i32
  }
  func.func @transform_1(%arg0: i32) -> (i32, i32) {
    %c0_i32 = arith.constant 0 : i32
    %c0_i32_0 = arith.constant 0 : i32
    return %arg0, %c0_i32 : i32, i32
  }
  func.func @transform_2(%arg0: i32) -> (i32, i32) {
    %c0_i32 = arith.constant 0 : i32
    %c0_i32_0 = arith.constant 0 : i32
    %c0_i32_1 = arith.constant 0 : i32
    return %c0_i32, %c0_i32_0 : i32, i32
  }
  func.func @transform_3(%arg0: i32) -> (i32, i32) {
    %c0_i32 = arith.constant 0 : i32
    %c0_i32_0 = arith.constant 0 : i32
    %c0_i32_1 = arith.constant 0 : i32
    return %c0_i32, %c0_i32_0 : i32, i32
  }
  func.func @transform_4(%arg0: i32) -> (i32, i32) {
    %c0_i32 = arith.constant 0 : i32
    %c0_i32_0 = arith.constant 0 : i32
    return %c0_i32, %arg0 : i32, i32
  }
}

</mosaic_0001>

<llo_original>
// kernel: tpu_custom_call.1
$region0: #{tpu_custom_call.1}
  #allocation0 [shape = 'u32[]', space=smem, size = 0x4, offset = 0x4, fixed_abs, tag = 'smem constant byte address 0x4 - core index']
  #allocation1 [shape = 'u32[144,128]{1,0:T(1,128)}', space=vmem, size = 0x12000, scoped, tag = 'internal scratch']
  %s0 = inlined_call_operand.vmem [shape: f32[128,32], index: 0, kind: input, shape index: {}]
  %s1 = inlined_call_operand.vmem [shape: f32[128,48], index: 1, kind: input, shape index: {}]
  %s2 = inlined_call_operand.vmem [shape: f32[200,64], index: 2, kind: input, shape index: {}]
  %s3 = inlined_call_operand.vmem [shape: f32[136,1], index: 3, kind: input, shape index: {}]
  %s4 = inlined_call_operand.hbm [shape: f32[1,128], index: 4, kind: output, shape index: {}]
  %s5 = sld [smem:[#allocation0]]
  $region26: #{tpu_custom_call.1} parent=0
    _
  %s7 = ssub.s32 1, %s5
  %s8 = scalar_select 0, %s7, %s5
  $region1: #{tpu_custom_call.1} parent=0
    #allocation2 [shape = 'u8[512]{0}', space=vmem, size = 0x400, scoped, tag = 'output window, operand 0, single buffered']
    #allocation3 [shape = 's32[1]{0}', space=sflag, size = 0x4, scoped, tag = 'scoped memory for tpu_custom_call.1']
    %9 = vsyncpa [#allocation3], 0
    // Predicated region
    $region2: #{tpu_custom_call.1} parent=1 // pred_check
      _
    $region3: #{tpu_custom_call.1} parent=1 // pred_check_branch
      %11 = sbr.rel (0) target = $region5
    $region4: #{tpu_custom_call.1} parent=1 // pred_region
      _
    $region5: #{tpu_custom_call.1} parent=1 // pred_fallthru
      _
    // Predicated region
    $region6: #{tpu_custom_call.1} parent=1 // pred_check
      _
    $region7: #{tpu_custom_call.1} parent=1 // pred_check_branch
      %13 = sbr.rel (0) target = $region9
    $region8: #{tpu_custom_call.1} parent=1 // pred_region
      _
    $region9: #{tpu_custom_call.1} parent=1 // pred_fallthru
      _
    // Predicated region
    $region10: #{tpu_custom_call.1} parent=1 // pred_check
      _
    $region11: #{tpu_custom_call.1} parent=1 // pred_check_branch
      %15 = sbr.rel (0) target = $region13
    $region12: #{tpu_custom_call.1} parent=1 // pred_region
      _
    $region13: #{tpu_custom_call.1} parent=1 // pred_fallthru
      _
    // Predicated region
    $region14: #{tpu_custom_call.1} parent=1 // pred_check
      _
    $region15: #{tpu_custom_call.1} parent=1 // pred_check_branch
      %17 = sbr.rel (0) target = $region17
    $region16: #{tpu_custom_call.1} parent=1 // pred_region
      _
    $region17: #{tpu_custom_call.1} parent=1 // pred_fallthru
      _
    %v18 = vld [vmem:[%s0] sm:$0xff]
    %v19 = vld [vmem:[%s0 + $0x8] sm:$0xff]
    %v20 = vld [vmem:[%s0 + $0x10] sm:$0xff]
    %v21 = vld [vmem:[%s0 + $0x18] sm:$0xff]
    %v22 = vld [vmem:[%s0 + $0x20] sm:$0xff]
    %v23 = vld [vmem:[%s0 + $0x28] sm:$0xff]
    %v24 = vld [vmem:[%s0 + $0x30] sm:$0xff]
    %v25 = vld [vmem:[%s0 + $0x38] sm:$0xff]
    %v26 = vld [vmem:[%s0 + $0x40] sm:$0xff]
    %v27 = vld [vmem:[%s0 + $0x48] sm:$0xff]
    %v28 = vld [vmem:[%s0 + $0x50] sm:$0xff]
    %v29 = vld [vmem:[%s0 + $0x58] sm:$0xff]
    %v30 = vld [vmem:[%s0 + $0x60] sm:$0xff]
    %v31 = vld [vmem:[%s0 + $0x68] sm:$0xff]
    %v32 = vld [vmem:[%s0 + $0x70] sm:$0xff]
    %v33 = vld [vmem:[%s0 + $0x78] sm:$0xff]
    %v34 = vld [vmem:[%s1] sm:$0xff]
    %v35 = vld [vmem:[%s1 + $0x8] sm:$0xff]
    %v36 = vld [vmem:[%s1 + $0x10] sm:$0xff]
    %v37 = vld [vmem:[%s1 + $0x18] sm:$0xff]
    %v38 = vld [vmem:[%s1 + $0x20] sm:$0xff]
    %v39 = vld [vmem:[%s1 + $0x28] sm:$0xff]
    %v40 = vld [vmem:[%s1 + $0x30] sm:$0xff]
    %v41 = vld [vmem:[%s1 + $0x38] sm:$0xff]
    %v42 = vld [vmem:[%s1 + $0x40] sm:$0xff]
    %v43 = vld [vmem:[%s1 + $0x48] sm:$0xff]
    %v44 = vld [vmem:[%s1 + $0x50] sm:$0xff]
    %v45 = vld [vmem:[%s1 + $0x58] sm:$0xff]
    %v46 = vld [vmem:[%s1 + $0x60] sm:$0xff]
    %v47 = vld [vmem:[%s1 + $0x68] sm:$0xff]
    %v48 = vld [vmem:[%s1 + $0x70] sm:$0xff]
    %v49 = vld [vmem:[%s1 + $0x78] sm:$0xff]
    %v50 = vld [vmem:[%s2] sm:$0xff]
    %v51 = vld [vmem:[%s2 + $0x8] sm:$0xff]
    %v52 = vld [vmem:[%s2 + $0x10] sm:$0xff]
    %v53 = vld [vmem:[%s2 + $0x18] sm:$0xff]
    %v54 = vld [vmem:[%s2 + $0x20] sm:$0xff]
    %v55 = vld [vmem:[%s2 + $0x28] sm:$0xff]
    %v56 = vld [vmem:[%s2 + $0x30] sm:$0xff]
    %v57 = vld [vmem:[%s2 + $0x38] sm:$0xff]
    %v58 = vld [vmem:[%s2 + $0x40] sm:$0xff]
    %v59 = vld [vmem:[%s2 + $0x48] sm:$0xff]
    %v60 = vld [vmem:[%s2 + $0x50] sm:$0xff]
    %v61 = vld [vmem:[%s2 + $0x58] sm:$0xff]
    %v62 = vld [vmem:[%s2 + $0x60] sm:$0xff]
    %v63 = vld [vmem:[%s2 + $0x68] sm:$0xff]
    %v64 = vld [vmem:[%s2 + $0x70] sm:$0xff]
    %v65 = vld [vmem:[%s2 + $0x78] sm:$0xff]
    %v66 = vld [vmem:[%s2 + $0x80] sm:$0xff]
    %v67 = vld [vmem:[%s2 + $0x88] sm:$0xff]
    %v68 = vld [vmem:[%s2 + $0x90] sm:$0xff]
    %v69 = vld [vmem:[%s2 + $0x98] sm:$0xff]
    %v70 = vld [vmem:[%s2 + $0xa0] sm:$0xff]
    %v71 = vld [vmem:[%s2 + $0xa8] sm:$0xff]
    %v72 = vld [vmem:[%s2 + $0xb0] sm:$0xff]
    %v73 = vld [vmem:[%s2 + $0xb8] sm:$0xff]
    %v74 = vld [vmem:[%s2 + $0xc0] sm:$0x1]
    %v75 = vld [vmem:[%s3] sm:$0xff]
    %v76 = vld [vmem:[%s3 + $0x8] sm:$0xff]
    %v77 = vld [vmem:[%s3 + $0x10] sm:$0xff]
    %v78 = vld [vmem:[%s3 + $0x18] sm:$0xff]
    %v79 = vld [vmem:[%s3 + $0x20] sm:$0xff]
    %v80 = vld [vmem:[%s3 + $0x28] sm:$0xff]
    %v81 = vld [vmem:[%s3 + $0x30] sm:$0xff]
    %v82 = vld [vmem:[%s3 + $0x38] sm:$0xff]
    %v83 = vld [vmem:[%s3 + $0x40] sm:$0xff]
    %v84 = vld [vmem:[%s3 + $0x48] sm:$0xff]
    %v85 = vld [vmem:[%s3 + $0x50] sm:$0xff]
    %v86 = vld [vmem:[%s3 + $0x58] sm:$0xff]
    %v87 = vld [vmem:[%s3 + $0x60] sm:$0xff]
    %v88 = vld [vmem:[%s3 + $0x68] sm:$0xff]
    %v89 = vld [vmem:[%s3 + $0x70] sm:$0xff]
    %v90 = vld [vmem:[%s3 + $0x78] sm:$0xff]
    %v91 = vld [vmem:[%s3 + $0x80] sm:$0x1]
    %93 = vset.pattern.permute.xlu0 0
    %94 = vperm.xlu0 %93, %v75
    %v95 = vpop.permute.xlu0 %94
    %98 = vset.pattern.permute.xlu0 0
    %99 = vperm.xlu0 %98, %v76
    %v100 = vpop.permute.xlu0 %99
    %103 = vset.pattern.permute.xlu0 0
    %104 = vperm.xlu0 %103, %v77
    %v105 = vpop.permute.xlu0 %104
    %108 = vset.pattern.permute.xlu0 0
    %109 = vperm.xlu0 %108, %v78
    %v110 = vpop.permute.xlu0 %109
    %vm112 = vcmask 261120
    %v114 = vsel %vm112, %v50, 0
    %v117 = vsel %vm112, %v51, 0
    %v120 = vsel %vm112, %v52, 0
    %v123 = vsel %vm112, %v53, 0
    %v126 = vsel %vm112, %v18, 0
    %v129 = vsel %vm112, %v19, 0
    %v132 = vsel %vm112, %v20, 0
    %v135 = vsel %vm112, %v21, 0
    %v138 = vsel %vm112, %v22, 0
    %v141 = vsel %vm112, %v23, 0
    %v144 = vsel %vm112, %v24, 0
    %v147 = vsel %vm112, %v25, 0
    %v150 = vsel %vm112, %v26, 0
    %v153 = vsel %vm112, %v27, 0
    %v156 = vsel %vm112, %v28, 0
    %v159 = vsel %vm112, %v29, 0
    %v162 = vsel %vm112, %v30, 0
    %v165 = vsel %vm112, %v31, 0
    %v168 = vsel %vm112, %v32, 0
    %v171 = vsel %vm112, %v33, 0
    %173 = vmatprep.subr.mxu0 0.0
    %174 = vmatpush1.xpose.msra.mxu0 %v171
    %175 = vmatprep.subr.mxu0 0.0
    %176 = vmatpush1.xpose.msra.mxu0 %v168
    %177 = vmatprep.subr.mxu0 0.0
    %178 = vmatpush1.xpose.msra.mxu0 %v165
    %179 = vmatprep.subr.mxu0 0.0
    %180 = vmatpush1.xpose.msra.mxu0 %v162
    %181 = vmatprep.subr.mxu0 0.0
    %182 = vmatpush1.xpose.msra.mxu0 %v159
    %183 = vmatprep.subr.mxu0 0.0
    %184 = vmatpush1.xpose.msra.mxu0 %v156
    %185 = vmatprep.subr.mxu0 0.0
    %186 = vmatpush1.xpose.msra.mxu0 %v153
    %187 = vmatprep.subr.mxu0 0.0
    %188 = vmatpush1.xpose.msra.mxu0 %v150
    %189 = vmatprep.subr.mxu0 0.0
    %190 = vmatpush1.xpose.msra.mxu0 %v147
    %191 = vmatprep.subr.mxu0 0.0
    %192 = vmatpush1.xpose.msra.mxu0 %v144
    %193 = vmatprep.subr.mxu0 0.0
    %194 = vmatpush1.xpose.msra.mxu0 %v141
    %195 = vmatprep.subr.mxu0 0.0
    %196 = vmatpush1.xpose.msra.mxu0 %v138
    %197 = vmatprep.subr.mxu0 0.0
    %198 = vmatpush1.xpose.msra.mxu0 %v135
    %199 = vmatprep.subr.mxu0 0.0
    %200 = vmatpush1.xpose.msra.mxu0 %v132
    %201 = vmatprep.subr.mxu0 0.0
    %202 = vmatpush1.xpose.msra.mxu0 %v129
    %203 = vmatprep.subr.mxu0 0.0
    %204 = vmatpush1.xpose.msra.mxu0 %v126
    %205 = vmatprep.subr.mxu0 0.0
    %206 = vmatpush2.xpose.msra.mxu0 0.0
    %207 = vmatprep.subr.mxu0 0.0
    %208 = vmatpush2.xpose.msra.mxu0 0.0
    %209 = vmatprep.subr.mxu0 0.0
    %210 = vmatpush2.xpose.msra.mxu0 0.0
    %211 = vmatprep.subr.mxu0 0.0
    %212 = vmatpush2.xpose.msra.mxu0 0.0
    %213 = vmatprep.subr.mxu0 0.0
    %214 = vmatpush2.xpose.msra.mxu0 0.0
    %215 = vmatprep.subr.mxu0 0.0
    %216 = vmatpush2.xpose.msra.mxu0 0.0
    %217 = vmatprep.subr.mxu0 0.0
    %218 = vmatpush2.xpose.msra.mxu0 0.0
    %219 = vmatprep.subr.mxu0 0.0
    %220 = vmatpush2.xpose.msra.mxu0 0.0
    %221 = vmatprep.subr.mxu0 0.0
    %222 = vmatpush2.xpose.msra.mxu0 0.0
    %223 = vmatprep.subr.mxu0 0.0
    %224 = vmatpush2.xpose.msra.mxu0 0.0
    %225 = vmatprep.subr.mxu0 0.0
    %226 = vmatpush2.xpose.msra.mxu0 0.0
    %227 = vmatprep.subr.mxu0 0.0
    %228 = vmatpush2.xpose.msra.mxu0 0.0
    %229 = vmatprep.subr.mxu0 0.0
    %230 = vmatpush2.xpose.msra.mxu0 0.0
    %231 = vmatprep.subr.mxu0 0.0
    %232 = vmatpush2.xpose.msra.mxu0 0.0
    %233 = vmatprep.subr.mxu0 0.0
    %234 = vmatpush2.xpose.msra.mxu0 0.0
    %235 = vmatprep.subr.mxu0 0.0
    %236 = vmatpush2.xpose.msra.mxu0 0.0
    %237 = vmatprep.mubr.f32.mxu0 0.0
    %238 = vmatmul.mubr.f32.gmra.mxu0 %v114
    %v239 = vpop.f32.mrf.mxu0
    %v240 = vadd.f32 %v95, %v239
    %v241 = vpop.f32.mrf.mxu0
    %242 = vmatprep.mubr.f32.mxu0 0.0
    %243 = vmatmul.mubr.f32.gmra.mxu0 %v117
    %v244 = vpop.f32.mrf.mxu0
    %v245 = vadd.f32 %v100, %v244
    %v246 = vpop.f32.mrf.mxu0
    %247 = vmatprep.mubr.f32.mxu0 0.0
    %248 = vmatmul.mubr.f32.gmra.mxu0 %v120
    %v249 = vpop.f32.mrf.mxu0
    %v250 = vadd.f32 %v105, %v249
    %v251 = vpop.f32.mrf.mxu0
    %252 = vmatprep.mubr.f32.mxu0 0.0
    %253 = vmatmul.mubr.f32.gmra.mxu0 %v123
    %v254 = vpop.f32.mrf.mxu0
    %v255 = vadd.f32 %v110, %v254
    %v256 = vpop.f32.mrf.mxu0
    %257 = vdwg.mxu0
    %v258 = vmax.f32 %v240, 0.0
    %v259 = vmax.f32 %v245, 0.0
    %v260 = vmax.f32 %v250, 0.0
    %v261 = vmax.f32 %v255, 0.0
    %263 = vset.pattern.permute.xlu0 0
    %264 = vperm.xlu0 %263, %v79
    %v265 = vpop.permute.xlu0 %264
    %268 = vset.pattern.permute.xlu0 0
    %269 = vperm.xlu0 %268, %v80
    %v270 = vpop.permute.xlu0 %269
    %273 = vset.pattern.permute.xlu0 0
    %274 = vperm.xlu0 %273, %v81
    %v275 = vpop.permute.xlu0 %274
    %278 = vset.pattern.permute.xlu0 0
    %279 = vperm.xlu0 %278, %v82
    %v280 = vpop.permute.xlu0 %279
    %vm282 = vcmask 392192
    %v284 = vsel %vm282, %v54, 0
    %v287 = vsel %vm282, %v55, 0
    %v290 = vsel %vm282, %v56, 0
    %v293 = vsel %vm282, %v57, 0
    %v296 = vsel %vm282, %v34, 0
    %v299 = vsel %vm282, %v35, 0
    %v302 = vsel %vm282, %v36, 0
    %v305 = vsel %vm282, %v37, 0
    %v308 = vsel %vm282, %v38, 0
    %v311 = vsel %vm282, %v39, 0
    %v314 = vsel %vm282, %v40, 0
    %v317 = vsel %vm282, %v41, 0
    %v320 = vsel %vm282, %v42, 0
    %v323 = vsel %vm282, %v43, 0
    %v326 = vsel %vm282, %v44, 0
    %v329 = vsel %vm282, %v45, 0
    %v332 = vsel %vm282, %v46, 0
    %v335 = vsel %vm282, %v47, 0
    %v338 = vsel %vm282, %v48, 0
    %v341 = vsel %vm282, %v49, 0
    %343 = vmatprep.subr.mxu0 0.0
    %344 = vmatpush1.xpose.msra.mxu0 %v341
    %345 = vmatprep.subr.mxu0 0.0
    %346 = vmatpush1.xpose.msra.mxu0 %v338
    %347 = vmatprep.subr.mxu0 0.0
    %348 = vmatpush1.xpose.msra.mxu0 %v335
    %349 = vmatprep.subr.mxu0 0.0
    %350 = vmatpush1.xpose.msra.mxu0 %v332
    %351 = vmatprep.subr.mxu0 0.0
    %352 = vmatpush1.xpose.msra.mxu0 %v329
    %353 = vmatprep.subr.mxu0 0.0
    %354 = vmatpush1.xpose.msra.mxu0 %v326
    %355 = vmatprep.subr.mxu0 0.0
    %356 = vmatpush1.xpose.msra.mxu0 %v323
    %357 = vmatprep.subr.mxu0 0.0
    %358 = vmatpush1.xpose.msra.mxu0 %v320
    %359 = vmatprep.subr.mxu0 0.0
    %360 = vmatpush1.xpose.msra.mxu0 %v317
    %361 = vmatprep.subr.mxu0 0.0
    %362 = vmatpush1.xpose.msra.mxu0 %v314
    %363 = vmatprep.subr.mxu0 0.0
    %364 = vmatpush1.xpose.msra.mxu0 %v311
    %365 = vmatprep.subr.mxu0 0.0
    %366 = vmatpush1.xpose.msra.mxu0 %v308
    %367 = vmatprep.subr.mxu0 0.0
    %368 = vmatpush1.xpose.msra.mxu0 %v305
    %369 = vmatprep.subr.mxu0 0.0
    %370 = vmatpush1.xpose.msra.mxu0 %v302
    %371 = vmatprep.subr.mxu0 0.0
    %372 = vmatpush1.xpose.msra.mxu0 %v299
    %373 = vmatprep.subr.mxu0 0.0
    %374 = vmatpush1.xpose.msra.mxu0 %v296
    %375 = vmatprep.subr.mxu0 0.0
    %376 = vmatpush2.xpose.msra.mxu0 0.0
    %377 = vmatprep.subr.mxu0 0.0
    %378 = vmatpush2.xpose.msra.mxu0 0.0
    %379 = vmatprep.subr.mxu0 0.0
    %380 = vmatpush2.xpose.msra.mxu0 0.0
    %381 = vmatprep.subr.mxu0 0.0
    %382 = vmatpush2.xpose.msra.mxu0 0.0
    %383 = vmatprep.subr.mxu0 0.0
    %384 = vmatpush2.xpose.msra.mxu0 0.0
    %385 = vmatprep.subr.mxu0 0.0
    %386 = vmatpush2.xpose.msra.mxu0 0.0
    %387 = vmatprep.subr.mxu0 0.0
    %388 = vmatpush2.xpose.msra.mxu0 0.0
    %389 = vmatprep.subr.mxu0 0.0
    %390 = vmatpush2.xpose.msra.mxu0 0.0
    %391 = vmatprep.subr.mxu0 0.0
    %392 = vmatpush2.xpose.msra.mxu0 0.0
    %393 = vmatprep.subr.mxu0 0.0
    %394 = vmatpush2.xpose.msra.mxu0 0.0
    %395 = vmatprep.subr.mxu0 0.0
    %396 = vmatpush2.xpose.msra.mxu0 0.0
    %397 = vmatprep.subr.mxu0 0.0
    %398 = vmatpush2.xpose.msra.mxu0 0.0
    %399 = vmatprep.subr.mxu0 0.0
    %400 = vmatpush2.xpose.msra.mxu0 0.0
    %401 = vmatprep.subr.mxu0 0.0
    %402 = vmatpush2.xpose.msra.mxu0 0.0
    %403 = vmatprep.subr.mxu0 0.0
    %404 = vmatpush2.xpose.msra.mxu0 0.0
    %405 = vmatprep.subr.mxu0 0.0
    %406 = vmatpush2.xpose.msra.mxu0 0.0
    %407 = vmatprep.mubr.f32.mxu0 0.0
    %408 = vmatmul.mubr.f32.gmra.mxu0 %v284
    %v409 = vpop.f32.mrf.mxu0
    %v410 = vadd.f32 %v265, %v409
    %v411 = vpop.f32.mrf.mxu0
    %412 = vmatprep.mubr.f32.mxu0 0.0
    %413 = vmatmul.mubr.f32.gmra.mxu0 %v287
    %v414 = vpop.f32.mrf.mxu0
    %v415 = vadd.f32 %v270, %v414
    %v416 = vpop.f32.mrf.mxu0
    %417 = vmatprep.mubr.f32.mxu0 0.0
    %418 = vmatmul.mubr.f32.gmra.mxu0 %v290
    %v419 = vpop.f32.mrf.mxu0
    %v420 = vadd.f32 %v275, %v419
    %v421 = vpop.f32.mrf.mxu0
    %422 = vmatprep.mubr.f32.mxu0 0.0
    %423 = vmatmul.mubr.f32.gmra.mxu0 %v293
    %v424 = vpop.f32.mrf.mxu0
    %v425 = vadd.f32 %v280, %v424
    %v426 = vpop.f32.mrf.mxu0
    %427 = vdwg.mxu0
    %v428 = vmax.f32 %v410, 0.0
    %v429 = vmax.f32 %v415, 0.0
    %v430 = vmax.f32 %v420, 0.0
    %v431 = vmax.f32 %v425, 0.0
    %v433 = vsel %vm112, %v66, 0
    %v436 = vsel %vm112, %v67, 0
    %v439 = vsel %vm112, %v68, 0
    %v442 = vsel %vm112, %v69, 0
    %v445 = vsel %vm112, %v70, 0
    %v448 = vsel %vm112, %v71, 0
    %v451 = vsel %vm112, %v72, 0
    %v454 = vsel %vm112, %v73, 0
    %456 = vmatprep.subr.mxu0 0.0
    %457 = vmatpush1.msra.mxu0 0.0
    %458 = vmatprep.subr.mxu0 0.0
    %459 = vmatpush1.msra.mxu0 0.0
    %460 = vmatprep.subr.mxu0 0.0
    %461 = vmatpush1.msra.mxu0 0.0
    %462 = vmatprep.subr.mxu0 0.0
    %463 = vmatpush1.msra.mxu0 0.0
    %464 = vmatprep.subr.mxu0 0.0
    %465 = vmatpush1.msra.mxu0 0.0
    %466 = vmatprep.subr.mxu0 0.0
    %467 = vmatpush1.msra.mxu0 0.0
    %468 = vmatprep.subr.mxu0 0.0
    %469 = vmatpush1.msra.mxu0 0.0
    %470 = vmatprep.subr.mxu0 0.0
    %471 = vmatpush1.msra.mxu0 0.0
    %472 = vmatprep.subr.mxu0 0.0
    %473 = vmatpush1.msra.mxu0 0.0
    %474 = vmatprep.subr.mxu0 0.0
    %475 = vmatpush1.msra.mxu0 0.0
    %476 = vmatprep.subr.mxu0 0.0
    %477 = vmatpush1.msra.mxu0 0.0
    %478 = vmatprep.subr.mxu0 0.0
    %479 = vmatpush1.msra.mxu0 0.0
    %480 = vmatprep.subr.mxu0 0.0
    %481 = vmatpush1.msra.mxu0 %v431
    %482 = vmatprep.subr.mxu0 0.0
    %483 = vmatpush1.msra.mxu0 %v430
    %484 = vmatprep.subr.mxu0 0.0
    %485 = vmatpush1.msra.mxu0 %v429
    %486 = vmatprep.subr.mxu0 0.0
    %487 = vmatpush1.msra.mxu0 %v428
    %488 = vmatprep.subr.mxu0 0.0
    %489 = vmatpush2.msra.mxu0 0.0
    %490 = vmatprep.subr.mxu0 0.0
    %491 = vmatpush2.msra.mxu0 0.0
    %492 = vmatprep.subr.mxu0 0.0
    %493 = vmatpush2.msra.mxu0 0.0
    %494 = vmatprep.subr.mxu0 0.0
    %495 = vmatpush2.msra.mxu0 0.0
    %496 = vmatprep.subr.mxu0 0.0
    %497 = vmatpush2.msra.mxu0 0.0
    %498 = vmatprep.subr.mxu0 0.0
    %499 = vmatpush2.msra.mxu0 0.0
    %500 = vmatprep.subr.mxu0 0.0
    %501 = vmatpush2.msra.mxu0 0.0
    %502 = vmatprep.subr.mxu0 0.0
    %503 = vmatpush2.msra.mxu0 0.0
    %504 = vmatprep.subr.mxu0 0.0
    %505 = vmatpush2.msra.mxu0 0.0
    %506 = vmatprep.subr.mxu0 0.0
    %507 = vmatpush2.msra.mxu0 0.0
    %508 = vmatprep.subr.mxu0 0.0
    %509 = vmatpush2.msra.mxu0 0.0
    %510 = vmatprep.subr.mxu0 0.0
    %511 = vmatpush2.msra.mxu0 0.0
    %512 = vmatprep.subr.mxu0 0.0
    %513 = vmatpush2.msra.mxu0 0.0
    %514 = vmatprep.subr.mxu0 0.0
    %515 = vmatpush2.msra.mxu0 0.0
    %516 = vmatprep.subr.mxu0 0.0
    %517 = vmatpush2.msra.mxu0 0.0
    %518 = vmatprep.subr.mxu0 0.0
    %519 = vmatpush2.msra.mxu0 0.0
    %520 = vmatprep.mubr.f32.mxu0 0.0
    %521 = vmatmul.mubr.f32.gmra.mxu0 %v433
    %v522 = vpop.f32.mrf.mxu0
    %v523 = vadd.f32 0.0, %v522
    %v524 = vpop.f32.mrf.mxu0
    %525 = vmatprep.mubr.f32.mxu0 0.0
    %526 = vmatmul.mubr.f32.gmra.mxu0 %v436
    %v527 = vpop.f32.mrf.mxu0
    %v528 = vadd.f32 0.0, %v527
    %v529 = vpop.f32.mrf.mxu0
    %530 = vmatprep.mubr.f32.mxu0 0.0
    %531 = vmatmul.mubr.f32.gmra.mxu0 %v439
    %v532 = vpop.f32.mrf.mxu0
    %v533 = vadd.f32 0.0, %v532
    %v534 = vpop.f32.mrf.mxu0
    %535 = vmatprep.mubr.f32.mxu0 0.0
    %536 = vmatmul.mubr.f32.gmra.mxu0 %v442
    %v537 = vpop.f32.mrf.mxu0
    %v538 = vadd.f32 0.0, %v537
    %v539 = vpop.f32.mrf.mxu0
    %540 = vmatprep.mubr.f32.mxu0 0.0
    %541 = vmatmul.mubr.f32.gmra.mxu0 %v445
    %v542 = vpop.f32.mrf.mxu0
    %v543 = vadd.f32 0.0, %v542
    %v544 = vpop.f32.mrf.mxu0
    %545 = vmatprep.mubr.f32.mxu0 0.0
    %546 = vmatmul.mubr.f32.gmra.mxu0 %v448
    %v547 = vpop.f32.mrf.mxu0
    %v548 = vadd.f32 0.0, %v547
    %v549 = vpop.f32.mrf.mxu0
    %550 = vmatprep.mubr.f32.mxu0 0.0
    %551 = vmatmul.mubr.f32.gmra.mxu0 %v451
    %v552 = vpop.f32.mrf.mxu0
    %v553 = vadd.f32 0.0, %v552
    %v554 = vpop.f32.mrf.mxu0
    %555 = vmatprep.mubr.f32.mxu0 0.0
    %556 = vmatmul.mubr.f32.gmra.mxu0 %v454
    %v557 = vpop.f32.mrf.mxu0
    %v558 = vadd.f32 0.0, %v557
    %v559 = vpop.f32.mrf.mxu0
    %560 = vdwg.mxu0
    %v562 = vsel %vm112, %v58, 0
    %v565 = vsel %vm112, %v59, 0
    %v568 = vsel %vm112, %v60, 0
    %v571 = vsel %vm112, %v61, 0
    %v574 = vsel %vm112, %v62, 0
    %v577 = vsel %vm112, %v63, 0
    %v580 = vsel %vm112, %v64, 0
    %v583 = vsel %vm112, %v65, 0
    %585 = vmatprep.subr.mxu0 0.0
    %586 = vmatpush1.msra.mxu0 0.0
    %587 = vmatprep.subr.mxu0 0.0
    %588 = vmatpush1.msra.mxu0 0.0
    %589 = vmatprep.subr.mxu0 0.0
    %590 = vmatpush1.msra.mxu0 0.0
    %591 = vmatprep.subr.mxu0 0.0
    %592 = vmatpush1.msra.mxu0 0.0
    %593 = vmatprep.subr.mxu0 0.0
    %594 = vmatpush1.msra.mxu0 0.0
    %595 = vmatprep.subr.mxu0 0.0
    %596 = vmatpush1.msra.mxu0 0.0
    %597 = vmatprep.subr.mxu0 0.0
    %598 = vmatpush1.msra.mxu0 0.0
    %599 = vmatprep.subr.mxu0 0.0
    %600 = vmatpush1.msra.mxu0 0.0
    %601 = vmatprep.subr.mxu0 0.0
    %602 = vmatpush1.msra.mxu0 0.0
    %603 = vmatprep.subr.mxu0 0.0
    %604 = vmatpush1.msra.mxu0 0.0
    %605 = vmatprep.subr.mxu0 0.0
    %606 = vmatpush1.msra.mxu0 0.0
    %607 = vmatprep.subr.mxu0 0.0
    %608 = vmatpush1.msra.mxu0 0.0
    %609 = vmatprep.subr.mxu0 0.0
    %610 = vmatpush1.msra.mxu0 %v261
    %611 = vmatprep.subr.mxu0 0.0
    %612 = vmatpush1.msra.mxu0 %v260
    %613 = vmatprep.subr.mxu0 0.0
    %614 = vmatpush1.msra.mxu0 %v259
    %615 = vmatprep.subr.mxu0 0.0
    %616 = vmatpush1.msra.mxu0 %v258
    %617 = vmatprep.subr.mxu0 0.0
    %618 = vmatpush2.msra.mxu0 0.0
    %619 = vmatprep.subr.mxu0 0.0
    %620 = vmatpush2.msra.mxu0 0.0
    %621 = vmatprep.subr.mxu0 0.0
    %622 = vmatpush2.msra.mxu0 0.0
    %623 = vmatprep.subr.mxu0 0.0
    %624 = vmatpush2.msra.mxu0 0.0
    %625 = vmatprep.subr.mxu0 0.0
    %626 = vmatpush2.msra.mxu0 0.0
    %627 = vmatprep.subr.mxu0 0.0
    %628 = vmatpush2.msra.mxu0 0.0
    %629 = vmatprep.subr.mxu0 0.0
    %630 = vmatpush2.msra.mxu0 0.0
    %631 = vmatprep.subr.mxu0 0.0
    %632 = vmatpush2.msra.mxu0 0.0
    %633 = vmatprep.subr.mxu0 0.0
    %634 = vmatpush2.msra.mxu0 0.0
    %635 = vmatprep.subr.mxu0 0.0
    %636 = vmatpush2.msra.mxu0 0.0
    %637 = vmatprep.subr.mxu0 0.0
    %638 = vmatpush2.msra.mxu0 0.0
    %639 = vmatprep.subr.mxu0 0.0
    %640 = vmatpush2.msra.mxu0 0.0
    %641 = vmatprep.subr.mxu0 0.0
    %642 = vmatpush2.msra.mxu0 0.0
    %643 = vmatprep.subr.mxu0 0.0
    %644 = vmatpush2.msra.mxu0 0.0
    %645 = vmatprep.subr.mxu0 0.0
    %646 = vmatpush2.msra.mxu0 0.0
    %647 = vmatprep.subr.mxu0 0.0
    %648 = vmatpush2.msra.mxu0 0.0
    %649 = vmatprep.mubr.f32.mxu0 0.0
    %650 = vmatmul.mubr.f32.gmra.mxu0 %v562
    %v651 = vpop.f32.mrf.mxu0
    %v652 = vadd.f32 %v523, %v651
    %v653 = vpop.f32.mrf.mxu0
    %654 = vmatprep.mubr.f32.mxu0 0.0
    %655 = vmatmul.mubr.f32.gmra.mxu0 %v565
    %v656 = vpop.f32.mrf.mxu0
    %v657 = vadd.f32 %v528, %v656
    %v658 = vpop.f32.mrf.mxu0
    %659 = vmatprep.mubr.f32.mxu0 0.0
    %660 = vmatmul.mubr.f32.gmra.mxu0 %v568
    %v661 = vpop.f32.mrf.mxu0
    %v662 = vadd.f32 %v533, %v661
    %v663 = vpop.f32.mrf.mxu0
    %664 = vmatprep.mubr.f32.mxu0 0.0
    %665 = vmatmul.mubr.f32.gmra.mxu0 %v571
    %v666 = vpop.f32.mrf.mxu0
    %v667 = vadd.f32 %v538, %v666
    %v668 = vpop.f32.mrf.mxu0
    %669 = vmatprep.mubr.f32.mxu0 0.0
    %670 = vmatmul.mubr.f32.gmra.mxu0 %v574
    %v671 = vpop.f32.mrf.mxu0
    %v672 = vadd.f32 %v543, %v671
    %v673 = vpop.f32.mrf.mxu0
    %674 = vmatprep.mubr.f32.mxu0 0.0
    %675 = vmatmul.mubr.f32.gmra.mxu0 %v577
    %v676 = vpop.f32.mrf.mxu0
    %v677 = vadd.f32 %v548, %v676
    %v678 = vpop.f32.mrf.mxu0
    %679 = vmatprep.mubr.f32.mxu0 0.0
    %680 = vmatmul.mubr.f32.gmra.mxu0 %v580
    %v681 = vpop.f32.mrf.mxu0
    %v682 = vadd.f32 %v553, %v681
    %v683 = vpop.f32.mrf.mxu0
    %684 = vmatprep.mubr.f32.mxu0 0.0
    %685 = vmatmul.mubr.f32.gmra.mxu0 %v583
    %v686 = vpop.f32.mrf.mxu0
    %v687 = vadd.f32 %v558, %v686
    %v688 = vpop.f32.mrf.mxu0
    %689 = vdwg.mxu0
    %691 = vset.pattern.permute.xlu0 0
    %692 = vperm.xlu0 %691, %v83
    %v693 = vpop.permute.xlu0 %692
    %696 = vset.pattern.permute.xlu0 0
    %697 = vperm.xlu0 %696, %v84
    %v698 = vpop.permute.xlu0 %697
    %701 = vset.pattern.permute.xlu0 0
    %702 = vperm.xlu0 %701, %v85
    %v703 = vpop.permute.xlu0 %702
    %706 = vset.pattern.permute.xlu0 0
    %707 = vperm.xlu0 %706, %v86
    %v708 = vpop.permute.xlu0 %707
    %711 = vset.pattern.permute.xlu0 0
    %712 = vperm.xlu0 %711, %v87
    %v713 = vpop.permute.xlu0 %712
    %716 = vset.pattern.permute.xlu0 0
    %717 = vperm.xlu0 %716, %v88
    %v718 = vpop.permute.xlu0 %717
    %721 = vset.pattern.permute.xlu0 0
    %722 = vperm.xlu0 %721, %v89
    %v723 = vpop.permute.xlu0 %722
    %726 = vset.pattern.permute.xlu0 0
    %727 = vperm.xlu0 %726, %v90
    %v728 = vpop.permute.xlu0 %727
    %v730 = vadd.f32 %v652, %v693
    %v731 = vadd.f32 %v657, %v698
    %v732 = vadd.f32 %v662, %v703
    %v733 = vadd.f32 %v667, %v708
    %v734 = vadd.f32 %v672, %v713
    %v735 = vadd.f32 %v677, %v718
    %v736 = vadd.f32 %v682, %v723
    %v737 = vadd.f32 %v687, %v728
    %v738 = vmax.f32 %v730, 0.0
    %v739 = vmax.f32 %v731, 0.0
    %v740 = vmax.f32 %v732, 0.0
    %v741 = vmax.f32 %v733, 0.0
    %v742 = vmax.f32 %v734, 0.0
    %v743 = vmax.f32 %v735, 0.0
    %v744 = vmax.f32 %v736, 0.0
    %v745 = vmax.f32 %v737, 0.0
    %747 = vset.pattern.permute.xlu0 0
    %748 = vperm.xlu0 %747, %v91
    %v749 = vpop.permute.xlu0 %748
    %vm751 = vcmask 523264
    %v753 = vsel %vm751, %v74, 0
    %755 = vmatprep.subr.mxu0 0.0
    %756 = vmatpush1.msra.mxu0 0.0
    %757 = vmatprep.subr.mxu0 0.0
    %758 = vmatpush1.msra.mxu0 0.0
    %759 = vmatprep.subr.mxu0 0.0
    %760 = vmatpush1.msra.mxu0 0.0
    %761 = vmatprep.subr.mxu0 0.0
    %762 = vmatpush1.msra.mxu0 0.0
    %763 = vmatprep.subr.mxu0 0.0
    %764 = vmatpush1.msra.mxu0 0.0
    %765 = vmatprep.subr.mxu0 0.0
    %766 = vmatpush1.msra.mxu0 0.0
    %767 = vmatprep.subr.mxu0 0.0
    %768 = vmatpush1.msra.mxu0 0.0
    %769 = vmatprep.subr.mxu0 0.0
    %770 = vmatpush1.msra.mxu0 0.0
    %771 = vmatprep.subr.mxu0 0.0
    %772 = vmatpush1.msra.mxu0 %v745
    %773 = vmatprep.subr.mxu0 0.0
    %774 = vmatpush1.msra.mxu0 %v744
    %775 = vmatprep.subr.mxu0 0.0
    %776 = vmatpush1.msra.mxu0 %v743
    %777 = vmatprep.subr.mxu0 0.0
    %778 = vmatpush1.msra.mxu0 %v742
    %779 = vmatprep.subr.mxu0 0.0
    %780 = vmatpush1.msra.mxu0 %v741
    %781 = vmatprep.subr.mxu0 0.0
    %782 = vmatpush1.msra.mxu0 %v740
    %783 = vmatprep.subr.mxu0 0.0
    %784 = vmatpush1.msra.mxu0 %v739
    %785 = vmatprep.subr.mxu0 0.0
    %786 = vmatpush1.msra.mxu0 %v738
    %787 = vmatprep.subr.mxu0 0.0
    %788 = vmatpush2.msra.mxu0 0.0
    %789 = vmatprep.subr.mxu0 0.0
    %790 = vmatpush2.msra.mxu0 0.0
    %791 = vmatprep.subr.mxu0 0.0
    %792 = vmatpush2.msra.mxu0 0.0
    %793 = vmatprep.subr.mxu0 0.0
    %794 = vmatpush2.msra.mxu0 0.0
    %795 = vmatprep.subr.mxu0 0.0
    %796 = vmatpush2.msra.mxu0 0.0
    %797 = vmatprep.subr.mxu0 0.0
    %798 = vmatpush2.msra.mxu0 0.0
    %799 = vmatprep.subr.mxu0 0.0
    %800 = vmatpush2.msra.mxu0 0.0
    %801 = vmatprep.subr.mxu0 0.0
    %802 = vmatpush2.msra.mxu0 0.0
    %803 = vmatprep.subr.mxu0 0.0
    %804 = vmatpush2.msra.mxu0 0.0
    %805 = vmatprep.subr.mxu0 0.0
    %806 = vmatpush2.msra.mxu0 0.0
    %807 = vmatprep.subr.mxu0 0.0
    %808 = vmatpush2.msra.mxu0 0.0
    %809 = vmatprep.subr.mxu0 0.0
    %810 = vmatpush2.msra.mxu0 0.0
    %811 = vmatprep.subr.mxu0 0.0
    %812 = vmatpush2.msra.mxu0 0.0
    %813 = vmatprep.subr.mxu0 0.0
    %814 = vmatpush2.msra.mxu0 0.0
    %815 = vmatprep.subr.mxu0 0.0
    %816 = vmatpush2.msra.mxu0 0.0
    %817 = vmatprep.subr.mxu0 0.0
    %818 = vmatpush2.msra.mxu0 0.0
    %819 = vmatprep.mubr.f32.mxu0 0.0
    %820 = vmatmul.mubr.f32.gmra.mxu0 %v753
    %v821 = vpop.f32.mrf.mxu0
    %v822 = vadd.f32 %v749, %v821
    %v823 = vpop.f32.mrf.mxu0
    %824 = vdwg.mxu0
    %v825 = vxor.u32 %v822, 2147483648
    %v826 = vmul.f32 %v825, 1.442695
    %v827 = vpow.pop %v826
    %v828 = vadd.f32 %v827, 1.0
    %v829 = vrcp.pop %v828
    %v830 = vmul.f32 1.0, %v829
    %831 = vst [vmem:[#allocation2] sm:$0x1] %v830
    // Predicated region
    $region18: #{tpu_custom_call.1} parent=1 // pred_check
      _
    $region19: #{tpu_custom_call.1} parent=1 // pred_check_branch
      %833 = sbr.rel (0) target = $region21
    $region20: #{tpu_custom_call.1} parent=1 // pred_region
      %s835 = ssub.s32 16, 16
      %836 = vsyncadd [#allocation3], %s835
      %s838 = sshll.u32 [#allocation2], 4
      %s839 = int_to_ptr.vmem [resolvable:$true] %s838
      %841 = dma.vmem_to_hbm [thread:$0]  %s839, 16, %s4, [#allocation3]
    $region21: #{tpu_custom_call.1} parent=1 // pred_fallthru
      _
    // Predicated region
    $region22: #{tpu_custom_call.1} parent=1 // pred_check
      _
    $region23: #{tpu_custom_call.1} parent=1 // pred_check_branch
      %843 = sbr.rel (0) target = $region25
    $region24: #{tpu_custom_call.1} parent=1 // pred_region
      %844 = dma.done [#allocation3], 16
    $region25: #{tpu_custom_call.1} parent=1 // pred_fallthru
      _
    %845 = vsyncpa [#allocation3], 1

</llo_original>
